<compile_context>
chip_gen: v6e
topology: v6e:2x2x1
jax: 0.10.0
libtpu: 0.0.40
codegen_flags: <defaults>
</compile_context>

<pallas_src>
import functools

import jax
import jax.numpy as jnp
from jax.experimental import pallas as pl
from jax.experimental.pallas import tpu as pltpu


_LANE = 128
_SUBLANE = 8
_TM_CAP = 1024                          # max batch-tile rows (tunable)
_VMEM_LIMIT_BYTES = 32 * 1024 * 1024    # explicit: v5e default scoped is 16 MiB
_VMEM_TILE_BUDGET = 26 * 1024 * 1024    # keep working set well under the limit


def _round_up(v, m):
    return (v + m - 1) // m * m


# ----------------------------------------------------------------------------
# Fused Pallas kernel: bottleneck -> fc -> softmax on one batch tile
# ----------------------------------------------------------------------------
def _cls_kernel(x_ref, w1_ref, b1_ref, w2_ref, b2_ref,
                bn_ref, fc_ref, sm_ref):
    # bottleneck = x @ W1 + b1
    # Cast x per tile on the VPU (near free) instead of a wrapper-side XLA
    # pass over HBM; accumulate in f32 on the MXU.
    x_bf16 = x_ref[...].astype(jnp.bfloat16)
    h = jnp.dot(x_bf16, w1_ref[...], preferred_element_type=jnp.float32)
    h = h + b1_ref[...]
    bn_ref[...] = h

    # fc = bottleneck @ W2 + b2  (bottleneck rounded to bf16 for the MXU)
    z = jnp.dot(h.astype(jnp.bfloat16), w2_ref[...],
                preferred_element_type=jnp.float32)
    z = z + b2_ref[...]
    fc_ref[...] = z

    # softmax(dim=-1) in f32; padded logit columns carry a -1e30 bias so
    # exp() == 0 and normalization only sees the real classes.
    m = jnp.max(z, axis=-1, keepdims=True)
    e = jnp.exp(z - m)
    s = jnp.sum(e, axis=-1, keepdims=True)
    sm_ref[...] = e * pl.reciprocal(s, approx=True)


@functools.lru_cache(maxsize=None)
def _build_cls_call(m_pad, tm, in_pad, hid_pad, out_pad):
    grid = (m_pad // tm,)
    return pl.pallas_call(
        _cls_kernel,
        grid=grid,
        in_specs=[
            pl.BlockSpec((tm, in_pad), lambda i: (i, 0)),        # x tile
            pl.BlockSpec((in_pad, hid_pad), lambda i: (0, 0)),   # W1 (invariant)
            pl.BlockSpec((1, hid_pad), lambda i: (0, 0)),        # b1 (invariant)
            pl.BlockSpec((hid_pad, out_pad), lambda i: (0, 0)),  # W2 (invariant)
            pl.BlockSpec((1, out_pad), lambda i: (0, 0)),        # b2 (invariant)
        ],
        out_specs=[
            pl.BlockSpec((tm, hid_pad), lambda i: (i, 0)),       # bottleneck out
            pl.BlockSpec((tm, out_pad), lambda i: (i, 0)),       # fc out
            pl.BlockSpec((tm, out_pad), lambda i: (i, 0)),       # softmax out
        ],
        out_shape=[
            jax.ShapeDtypeStruct((m_pad, hid_pad), jnp.float32),
            jax.ShapeDtypeStruct((m_pad, out_pad), jnp.float32),
            jax.ShapeDtypeStruct((m_pad, out_pad), jnp.float32),
        ],
        compiler_params=pltpu.CompilerParams(
            dimension_semantics=("parallel",),
            vmem_limit_bytes=_VMEM_LIMIT_BYTES),
    )


def _choose_m_tiling(m, in_pad, hid_pad, out_pad, x_itemsize):
    """Pick (m_pad, tm): sublane aligned, VMEM-budgeted, >=2 grid steps for
    non-tiny batches (v7x megacore), and bounded padded-tail waste."""
    m8 = _round_up(m, _SUBLANE)

    # Per-row bytes of double-buffered pipeline tiles (x input + 3 f32 outputs)
    row_bytes = (2 * in_pad * x_itemsize
                 + 2 * (hid_pad + 2 * out_pad) * 4)
    # Invariant bf16 weights / f32 biases (pipeline still double-buffers them).
    fixed_bytes = (2 * (in_pad * hid_pad + hid_pad * out_pad) * 2
                   + 2 * (hid_pad + out_pad) * 4)
    cap = max((_VMEM_TILE_BUDGET - fixed_bytes) // row_bytes, _SUBLANE)
    cap = max(_SUBLANE, (min(cap, _TM_CAP) // _SUBLANE) * _SUBLANE)

    if m8 <= 2 * _SUBLANE:
        # Tiny batch: a single tile, no padded-tail waste, nothing to shard.
        return m8, m8

    n_steps = max(2, pl.cdiv(m8, cap))
    tm = min(cap, _round_up(pl.cdiv(m8, n_steps), _SUBLANE))
    m_pad = _round_up(m8, tm)
    return m_pad, tm


# ----------------------------------------------------------------------------
# Forward pass (== CLS.forward: returns [x, bottleneck(x), fc(...), softmax(...)])
# ----------------------------------------------------------------------------
def cls_forward(x, params):
    w1, b1 = params["w1"], params["b1"]
    w2, b2 = params["w2"], params["b2"]

    m, in_dim = x.shape
    hid = w1.shape[1]
    out_dim = w2.shape[1]

    # Lane-dense padding on every matmul dim (sliced off below):
    #  - in_dim : unmasked x loads / aligned K on the first matmul
    #  - hid    : aligned K on the second matmul, lane-dense bn stores
    #  - out_dim: lane-dense fc/softmax stores
    in_pad = _round_up(in_dim, _LANE)
    hid_pad = _round_up(hid, _LANE)
    out_pad = _round_up(out_dim, _LANE)

    m_pad, tm = _choose_m_tiling(m, in_pad, hid_pad, out_pad,
                                 jnp.dtype(x.dtype).itemsize)

    x_p = x
    if m_pad != m or in_pad != in_dim:
        x_p = jnp.pad(x, ((0, m_pad - m), (0, in_pad - in_dim)))

    w1_p, b1_p, w2_p, b2_p = w1, b1, w2, b2
    if in_pad != in_dim:
        w1_p = jnp.pad(w1_p, ((0, in_pad - in_dim), (0, 0)))
    if hid_pad != hid:
        w1_p = jnp.pad(w1_p, ((0, 0), (0, hid_pad - hid)))
        b1_p = jnp.pad(b1_p, ((0, 0), (0, hid_pad - hid)))
        w2_p = jnp.pad(w2_p, ((0, hid_pad - hid), (0, 0)))
    if out_pad != out_dim:
        # padded classes: weight 0, bias -1e30 => exp() == 0 under softmax
        w2_p = jnp.pad(w2_p, ((0, 0), (0, out_pad - out_dim)))
        b2_p = jnp.pad(b2_p, ((0, 0), (0, out_pad - out_dim)),
                       constant_values=-1e30)

    call = _build_cls_call(m_pad, tm, in_pad, hid_pad, out_pad)
    # TODO(synk): bf16 MXU operands with f32 accumulation ~= JAX's default TPU
    # matmul precision; fc/softmax additionally see a bf16-rounded bottleneck
    # (~1e-2 relative on logits). Bit-exact parity with PyTorch f32 Linear
    # would need precision=HIGHEST at ~3x MXU cost.
    bn, fc, sm = call(
        x_p,                          # cast to bf16 per tile inside the kernel
        w1_p.astype(jnp.bfloat16),
        b1_p.astype(jnp.float32),
        w2_p.astype(jnp.bfloat16),
        b2_p.astype(jnp.float32),
    )

    bn = bn[:m, :hid]
    fc = fc[:m, :out_dim]
    sm = sm[:m, :out_dim]
    return [x, bn, fc, sm]


cls_forward_jit = jax.jit(cls_forward)


# ----------------------------------------------------------------------------
# Deterministic synthetic parameters (nn.Linear-style uniform init).
# Weights stored directly in (in, out) layout (transposed vs torch's (out, in)).
# ----------------------------------------------------------------------------
def init_cls_params(key, in_dim, out_dim, bottle_neck_dim=256):
    k1, k2, k3, k4 = jax.random.split(key, 4)
    lim1 = 1.0 / float(in_dim) ** 0.5
    lim2 = 1.0 / float(bottle_neck_dim) ** 0.5
    return {
        "w1": jax.random.uniform(k1, (in_dim, bottle_neck_dim), jnp.float32,
                                 -lim1, lim1),
        "b1": jax.random.uniform(k2, (1, bottle_neck_dim), jnp.float32,
                                 -lim1, lim1),
        "w2": jax.random.uniform(k3, (bottle_neck_dim, out_dim), jnp.float32,
                                 -lim2, lim2),
        "b2": jax.random.uniform(k4, (1, out_dim), jnp.float32,
                                 -lim2, lim2),
    }


if __name__ == "__main__":
    key = jax.random.PRNGKey(0)
    pkey, xkey = jax.random.split(key)

    batch, in_dim, out_dim = 2, 32, 10     # bottle_neck_dim = 256 (module default)
    params = init_cls_params(pkey, in_dim, out_dim)
    x = jax.random.normal(xkey, (batch, in_dim), jnp.float32)

    outs = cls_forward_jit(x, params)
    outs = jax.block_until_ready(outs)
    x_out, bn_out, fc_out, sm_out = outs

    assert x_out.shape == (batch, in_dim), x_out.shape
    assert bn_out.shape == (batch, 256), bn_out.shape
    assert fc_out.shape == (batch, out_dim), fc_out.shape
    assert sm_out.shape == (batch, out_dim), sm_out.shape
    assert bool(jnp.all(jnp.isfinite(bn_out)))
    assert bool(jnp.all(jnp.isfinite(fc_out)))
    assert bool(jnp.all(jnp.isfinite(sm_out)))
    # approx-reciprocal softmax: rows sum to 1 within ~2^-12 relative error
    assert bool(jnp.allclose(jnp.sum(sm_out, axis=-1), 1.0, atol=2e-3))
    print("KERNEL_OK")
</pallas_src>

<mosaic_0001>
module attributes {stable_mosaic.version = 11 : i64} {
  func.func @_cls_kernel(%arg0: i32, %arg1: memref<8x128xf32, #tpu.memory_space<vmem>>, %arg2: memref<128x256xbf16, #tpu.memory_space<vmem>>, %arg3: memref<1x256xf32, #tpu.memory_space<vmem>>, %arg4: memref<256x128xbf16, #tpu.memory_space<vmem>>, %arg5: memref<1x128xf32, #tpu.memory_space<vmem>>, %arg6: memref<8x256xf32, #tpu.memory_space<vmem>>, %arg7: memref<8x128xf32, #tpu.memory_space<vmem>>, %arg8: memref<8x128xf32, #tpu.memory_space<vmem>>) attributes {dimension_semantics = [#tpu.dimension_semantics<parallel>], iteration_bounds = array<i64: 1>, scalar_prefetch = 0 : i64, scratch_operands = 0 : i64, tpu.core_type = #tpu.core_type<tc>, window_params = [{transform_indices = @transform_0, window_bounds = array<i64: 8, 128>}, {pipeline_mode = #tpu.pipeline_mode<synchronous>, transform_indices = @transform_1, window_bounds = array<i64: 128, 256>}, {pipeline_mode = #tpu.pipeline_mode<synchronous>, transform_indices = @transform_2, window_bounds = array<i64: 1, 256>}, {pipeline_mode = #tpu.pipeline_mode<synchronous>, transform_indices = @transform_3, window_bounds = array<i64: 256, 128>}, {pipeline_mode = #tpu.pipeline_mode<synchronous>, transform_indices = @transform_4, window_bounds = array<i64: 1, 128>}, {transform_indices = @transform_5, window_bounds = array<i64: 8, 256>}, {transform_indices = @transform_6, window_bounds = array<i64: 8, 128>}, {transform_indices = @transform_7, window_bounds = array<i64: 8, 128>}]} {
    %c0 = arith.constant 0 : index
    %c0_0 = arith.constant 0 : index
    %0 = vector.load %arg1[%c0, %c0_0] : memref<8x128xf32, #tpu.memory_space<vmem>>, vector<8x128xf32>
    %1 = arith.truncf %0 : vector<8x128xf32> to vector<8x128xbf16>
    %c0_1 = arith.constant 0 : index
    %c0_2 = arith.constant 0 : index
    %2 = vector.load %arg2[%c0_1, %c0_2] : memref<128x256xbf16, #tpu.memory_space<vmem>>, vector<128x256xbf16>
    %cst = arith.constant dense<0.000000e+00> : vector<8x256xf32>
    %3 = tpu.matmul %1, %2, %cst {dimension_numbers = #tpu.dot_dimension_numbers<[1], [0], [0], [1], [0, 0, 1, 1], [], []>} : vector<8x128xbf16>, vector<128x256xbf16>, vector<8x256xf32> -> vector<8x256xf32>
    %c0_3 = arith.constant 0 : index
    %c0_4 = arith.constant 0 : index
    %4 = vector.load %arg3[%c0_3, %c0_4] : memref<1x256xf32, #tpu.memory_space<vmem>>, vector<1x256xf32>
    %5 = vector.broadcast %4 : vector<1x256xf32> to vector<8x256xf32>
    %6 = arith.addf %3, %5 : vector<8x256xf32>
    %c0_5 = arith.constant 0 : index
    %c0_6 = arith.constant 0 : index
    %7 = vector.load %arg6[%c0_5, %c0_6] : memref<8x256xf32, #tpu.memory_space<vmem>>, vector<8x256xf32>
    tpu.vector_store %arg6[%c0_5, %c0_6], %6 {strides = array<i32>} : memref<8x256xf32, #tpu.memory_space<vmem>>, vector<8x256xf32>,
    %8 = arith.truncf %6 : vector<8x256xf32> to vector<8x256xbf16>
    %c0_7 = arith.constant 0 : index
    %c0_8 = arith.constant 0 : index
    %9 = vector.load %arg4[%c0_7, %c0_8] : memref<256x128xbf16, #tpu.memory_space<vmem>>, vector<256x128xbf16>
    %cst_9 = arith.constant dense<0.000000e+00> : vector<8x128xf32>
    %10 = tpu.matmul %8, %9, %cst_9 {dimension_numbers = #tpu.dot_dimension_numbers<[1], [0], [0], [1], [0, 0, 1, 1], [], []>} : vector<8x256xbf16>, vector<256x128xbf16>, vector<8x128xf32> -> vector<8x128xf32>
    %c0_10 = arith.constant 0 : index
    %c0_11 = arith.constant 0 : index
    %11 = vector.load %arg5[%c0_10, %c0_11] : memref<1x128xf32, #tpu.memory_space<vmem>>, vector<1x128xf32>
    %12 = vector.broadcast %11 : vector<1x128xf32> to vector<8x128xf32>
    %13 = arith.addf %10, %12 : vector<8x128xf32>
    %c0_12 = arith.constant 0 : index
    %c0_13 = arith.constant 0 : index
    %14 = vector.load %arg7[%c0_12, %c0_13] : memref<8x128xf32, #tpu.memory_space<vmem>>, vector<8x128xf32>
    tpu.vector_store %arg7[%c0_12, %c0_13], %13 {strides = array<i32>} : memref<8x128xf32, #tpu.memory_space<vmem>>, vector<8x128xf32>,
    %cst_14 = arith.constant dense<0xFF800000> : vector<8xf32>
    %15 = vector.multi_reduction <maximumf>, %13, %cst_14 [1] : vector<8x128xf32> to vector<8xf32>
    %16 = vector.shape_cast %15 : vector<8xf32> to vector<8x1xf32>
    %17 = vector.broadcast %16 : vector<8x1xf32> to vector<8x128xf32>
    %18 = arith.subf %13, %17 : vector<8x128xf32>
    %19 = math.exp %18 : vector<8x128xf32>
    %cst_15 = arith.constant dense<0.000000e+00> : vector<8xf32>
    %20 = vector.multi_reduction <add>, %19, %cst_15 [1] : vector<8x128xf32> to vector<8xf32>
    %21 = vector.shape_cast %20 : vector<8xf32> to vector<8x1xf32>
    %22 = tpu.reciprocal %21 {approx = true} : vector<8x1xf32> -> vector<8x1xf32>
    %23 = vector.broadcast %22 : vector<8x1xf32> to vector<8x128xf32>
    %24 = arith.mulf %19, %23 : vector<8x128xf32>
    %c0_16 = arith.constant 0 : index
    %c0_17 = arith.constant 0 : index
    %25 = vector.load %arg8[%c0_16, %c0_17] : memref<8x128xf32, #tpu.memory_space<vmem>>, vector<8x128xf32>
    tpu.vector_store %arg8[%c0_16, %c0_17], %24 {strides = array<i32>} : memref<8x128xf32, #tpu.memory_space<vmem>>, vector<8x128xf32>,
    return
  }
  func.func @transform_0(%arg0: i32) -> (i32, i32) {
    %c0_i32 = arith.constant 0 : i32
    %c0_i32_0 = arith.constant 0 : i32
    return %arg0, %c0_i32 : i32, i32
  }
  func.func @transform_1(%arg0: i32) -> (i32, i32) {
    %c0_i32 = arith.constant 0 : i32
    %c0_i32_0 = arith.constant 0 : i32
    %c0_i32_1 = arith.constant 0 : i32
    return %c0_i32, %c0_i32_0 : i32, i32
  }
  func.func @transform_2(%arg0: i32) -> (i32, i32) {
    %c0_i32 = arith.constant 0 : i32
    %c0_i32_0 = arith.constant 0 : i32
    %c0_i32_1 = arith.constant 0 : i32
    return %c0_i32, %c0_i32_0 : i32, i32
  }
  func.func @transform_3(%arg0: i32) -> (i32, i32) {
    %c0_i32 = arith.constant 0 : i32
    %c0_i32_0 = arith.constant 0 : i32
    %c0_i32_1 = arith.constant 0 : i32
    return %c0_i32, %c0_i32_0 : i32, i32
  }
  func.func @transform_4(%arg0: i32) -> (i32, i32) {
    %c0_i32 = arith.constant 0 : i32
    %c0_i32_0 = arith.constant 0 : i32
    %c0_i32_1 = arith.constant 0 : i32
    return %c0_i32, %c0_i32_0 : i32, i32
  }
  func.func @transform_5(%arg0: i32) -> (i32, i32) {
    %c0_i32 = arith.constant 0 : i32
    %c0_i32_0 = arith.constant 0 : i32
    return %arg0, %c0_i32 : i32, i32
  }
  func.func @transform_6(%arg0: i32) -> (i32, i32) {
    %c0_i32 = arith.constant 0 : i32
    %c0_i32_0 = arith.constant 0 : i32
    return %arg0, %c0_i32 : i32, i32
  }
  func.func @transform_7(%arg0: i32) -> (i32, i32) {
    %c0_i32 = arith.constant 0 : i32
    %c0_i32_0 = arith.constant 0 : i32
    return %arg0, %c0_i32 : i32, i32
  }
}

</mosaic_0001>

<llo_original>
// kernel: cls_forward.1
$region0: #{cls_forward.1}
  #allocation0 [shape = 'u32[]', space=smem, size = 0x4, offset = 0x4, fixed_abs, tag = 'smem constant byte address 0x4 - core index']
  #allocation1 [shape = 'u32[144,128]{1,0:T(1,128)}', space=vmem, size = 0x12000, scoped, tag = 'internal scratch']
  %s0 = inlined_call_operand.vmem [shape: f32[8,128], index: 0, kind: input, shape index: {}]
  %s1 = inlined_call_operand.vmem [shape: bf16[128,256], index: 1, kind: input, shape index: {}]
  %s2 = inlined_call_operand.vmem [shape: f32[1,256], index: 2, kind: input, shape index: {}]
  %s3 = inlined_call_operand.vmem [shape: bf16[256,128], index: 3, kind: input, shape index: {}]
  %s4 = inlined_call_operand.vmem [shape: f32[1,128], index: 4, kind: input, shape index: {}]
  %s5 = inlined_call_operand.vmem [shape: f32[8,256], index: 5, kind: output, shape index: {0}]
  %s6 = inlined_call_operand.vmem [shape: f32[8,128], index: 6, kind: output, shape index: {1}]
  %s7 = inlined_call_operand.vmem [shape: f32[8,128], index: 7, kind: output, shape index: {2}]
  %8 = xla_tuple %s5, %s6, %s7
  %s9 = sld [smem:[#allocation0]]
  $region46: #{cls_forward.1} parent=0
    _
  %s11 = ssub.s32 1, %s9
  %s12 = scalar_select 0, %s11, %s9
  // Predicated region
  $region2: #{cls_forward.1} parent=0 // pred_check
    _
  $region3: #{cls_forward.1} parent=0 // pred_check_branch
    %14 = sbr.rel (0) target = $region5
  $region4: #{cls_forward.1} parent=0 // pred_region
    _
  $region5: #{cls_forward.1} parent=0 // pred_fallthru
    _
  // Predicated region
  $region6: #{cls_forward.1} parent=0 // pred_check
    _
  $region7: #{cls_forward.1} parent=0 // pred_check_branch
    %16 = sbr.rel (0) target = $region9
  $region8: #{cls_forward.1} parent=0 // pred_region
    _
  $region9: #{cls_forward.1} parent=0 // pred_fallthru
    _
  // Predicated region
  $region10: #{cls_forward.1} parent=0 // pred_check
    _
  $region11: #{cls_forward.1} parent=0 // pred_check_branch
    %18 = sbr.rel (0) target = $region13
  $region12: #{cls_forward.1} parent=0 // pred_region
    _
  $region13: #{cls_forward.1} parent=0 // pred_fallthru
    _
  // Predicated region
  $region14: #{cls_forward.1} parent=0 // pred_check
    _
  $region15: #{cls_forward.1} parent=0 // pred_check_branch
    %20 = sbr.rel (0) target = $region17
  $region16: #{cls_forward.1} parent=0 // pred_region
    _
  $region17: #{cls_forward.1} parent=0 // pred_fallthru
    _
  // Predicated region
  $region18: #{cls_forward.1} parent=0 // pred_check
    _
  $region19: #{cls_forward.1} parent=0 // pred_check_branch
    %22 = sbr.rel (0) target = $region21
  $region20: #{cls_forward.1} parent=0 // pred_region
    _
  $region21: #{cls_forward.1} parent=0 // pred_fallthru
    _
  %v24 = vld [vmem:[%s0] sm:$0xff]
  %v25 = vpack.c.bf16 %v24, %v24
  %v26 = vld [vmem:[%s1] sm:$0xff]
  %v27 = vld [vmem:[%s1 + $0x8] sm:$0xff]
  %v28 = vld [vmem:[%s1 + $0x10] sm:$0xff]
  %v29 = vld [vmem:[%s1 + $0x18] sm:$0xff]
  %v30 = vld [vmem:[%s1 + $0x20] sm:$0xff]
  %v31 = vld [vmem:[%s1 + $0x28] sm:$0xff]
  %v32 = vld [vmem:[%s1 + $0x30] sm:$0xff]
  %v33 = vld [vmem:[%s1 + $0x38] sm:$0xff]
  %v34 = vld [vmem:[%s1 + $0x40] sm:$0xff]
  %v35 = vld [vmem:[%s1 + $0x48] sm:$0xff]
  %v36 = vld [vmem:[%s1 + $0x50] sm:$0xff]
  %v37 = vld [vmem:[%s1 + $0x58] sm:$0xff]
  %v38 = vld [vmem:[%s1 + $0x60] sm:$0xff]
  %v39 = vld [vmem:[%s1 + $0x68] sm:$0xff]
  %v40 = vld [vmem:[%s1 + $0x70] sm:$0xff]
  %v41 = vld [vmem:[%s1 + $0x78] sm:$0xff]
  %v42 = vld [vmem:[%s2] sm:$0x3]
  %v44 = vlaneseq
  %v45 = vshrl.u32 %v44, 7
  %v46 = vsub.s32 0, %v45
  %v47 = vrot.slane %v42, %v46
  %v48 = vlaneseq
  %v49 = vshrl.u32 %v48, 7
  %v50 = vsub.s32 1, %v49
  %v51 = vrot.slane %v42, %v50
  %v70 = vunpack.c.l.b16 %v26
  %v71 = vunpack.c.h.b16 %v26
  %v72 = vunpack.c.l.b16 %v27
  %v73 = vunpack.c.h.b16 %v27
  %v74 = vunpack.c.l.b16 %v28
  %v75 = vunpack.c.h.b16 %v28
  %v76 = vunpack.c.l.b16 %v29
  %v77 = vunpack.c.h.b16 %v29
  %v78 = vunpack.c.l.b16 %v30
  %v79 = vunpack.c.h.b16 %v30
  %v80 = vunpack.c.l.b16 %v31
  %v81 = vunpack.c.h.b16 %v31
  %v82 = vunpack.c.l.b16 %v32
  %v83 = vunpack.c.h.b16 %v32
  %v84 = vunpack.c.l.b16 %v33
  %v85 = vunpack.c.h.b16 %v33
  %v86 = vunpack.c.l.b16 %v34
  %v87 = vunpack.c.h.b16 %v34
  %v88 = vunpack.c.l.b16 %v35
  %v89 = vunpack.c.h.b16 %v35
  %v90 = vunpack.c.l.b16 %v36
  %v91 = vunpack.c.h.b16 %v36
  %v92 = vunpack.c.l.b16 %v37
  %v93 = vunpack.c.h.b16 %v37
  %v94 = vunpack.c.l.b16 %v38
  %v95 = vunpack.c.h.b16 %v38
  %v96 = vunpack.c.l.b16 %v39
  %v97 = vunpack.c.h.b16 %v39
  %v98 = vunpack.c.l.b16 %v40
  %v99 = vunpack.c.h.b16 %v40
  %v100 = vunpack.c.l.b16 %v41
  %v101 = vunpack.c.h.b16 %v41
  %v102 = vpack.c.b16 %v72, %v70
  %v103 = vpack.c.b16 %v73, %v71
  %v104 = vpack.c.b16 %v76, %v74
  %v105 = vpack.c.b16 %v77, %v75
  %v106 = vpack.c.b16 %v80, %v78
  %v107 = vpack.c.b16 %v81, %v79
  %v108 = vpack.c.b16 %v84, %v82
  %v109 = vpack.c.b16 %v85, %v83
  %v110 = vpack.c.b16 %v88, %v86
  %v111 = vpack.c.b16 %v89, %v87
  %v112 = vpack.c.b16 %v92, %v90
  %v113 = vpack.c.b16 %v93, %v91
  %v114 = vpack.c.b16 %v96, %v94
  %v115 = vpack.c.b16 %v97, %v95
  %v116 = vpack.c.b16 %v100, %v98
  %v117 = vpack.c.b16 %v101, %v99
  %134 = vmatprep.subr.bf16.mxu0 %v117
  %135 = vmatpush1.bf16.msra.mxu0 %v116
  %136 = vmatprep.subr.bf16.mxu0 %v115
  %137 = vmatpush1.bf16.msra.mxu0 %v114
  %138 = vmatprep.subr.bf16.mxu0 %v113
  %139 = vmatpush1.bf16.msra.mxu0 %v112
  %140 = vmatprep.subr.bf16.mxu0 %v111
  %141 = vmatpush1.bf16.msra.mxu0 %v110
  %142 = vmatprep.subr.bf16.mxu0 %v109
  %143 = vmatpush1.bf16.msra.mxu0 %v108
  %144 = vmatprep.subr.bf16.mxu0 %v107
  %145 = vmatpush1.bf16.msra.mxu0 %v106
  %146 = vmatprep.subr.bf16.mxu0 %v105
  %147 = vmatpush1.bf16.msra.mxu0 %v104
  %148 = vmatprep.subr.bf16.mxu0 %v103
  %149 = vmatpush1.bf16.msra.mxu0 %v102
  %150 = vmatprep.subr.bf16.mxu0 0
  %151 = vmatpush2.bf16.msra.mxu0 0
  %152 = vmatprep.subr.bf16.mxu0 0
  %153 = vmatpush2.bf16.msra.mxu0 0
  %154 = vmatprep.subr.bf16.mxu0 0
  %155 = vmatpush2.bf16.msra.mxu0 0
  %156 = vmatprep.subr.bf16.mxu0 0
  %157 = vmatpush2.bf16.msra.mxu0 0
  %158 = vmatprep.subr.bf16.mxu0 0
  %159 = vmatpush2.bf16.msra.mxu0 0
  %160 = vmatprep.subr.bf16.mxu0 0
  %161 = vmatpush2.bf16.msra.mxu0 0
  %162 = vmatprep.subr.bf16.mxu0 0
  %163 = vmatpush2.bf16.msra.mxu0 0
  %164 = vmatprep.subr.bf16.mxu0 0
  %165 = vmatpush2.bf16.msra.mxu0 0
  %166 = vmatprep.mubr.bf16.mxu0 0
  %167 = vmatmul.mubr.bf16.gmra.mxu0 %v25
  %v168 = vpop.f32.mrf.mxu0
  %v169 = vadd.f32 %v47, %v168
  %v170 = vpop.f32.mrf.mxu0
  %v171 = vadd.f32 %v51, %v170
  %v172 = vpop.f32.mrf.mxu0
  %v173 = vpop.f32.mrf.mxu0
  %174 = vdwg.mxu0
  %175 = vst [vmem:[%s5] sm:$0xff] %v169
  %176 = vst [vmem:[%s5 + $0x8] sm:$0xff] %v171
  %v177 = vpack.c.bf16 %v169, %v169
  %v178 = vpack.c.bf16 %v171, %v171
  %v179 = vld [vmem:[%s3] sm:$0xf]
  %v180 = vld [vmem:[%s3 + $0x4] sm:$0xf]
  %v181 = vld [vmem:[%s3 + $0x8] sm:$0xf]
  %v182 = vld [vmem:[%s3 + $0xc] sm:$0xf]
  %v183 = vld [vmem:[%s3 + $0x10] sm:$0xf]
  %v184 = vld [vmem:[%s3 + $0x14] sm:$0xf]
  %v185 = vld [vmem:[%s3 + $0x18] sm:$0xf]
  %v186 = vld [vmem:[%s3 + $0x1c] sm:$0xf]
  %v187 = vld [vmem:[%s3 + $0x20] sm:$0xf]
  %v188 = vld [vmem:[%s3 + $0x24] sm:$0xf]
  %v189 = vld [vmem:[%s3 + $0x28] sm:$0xf]
  %v190 = vld [vmem:[%s3 + $0x2c] sm:$0xf]
  %v191 = vld [vmem:[%s3 + $0x30] sm:$0xf]
  %v192 = vld [vmem:[%s3 + $0x34] sm:$0xf]
  %v193 = vld [vmem:[%s3 + $0x38] sm:$0xf]
  %v194 = vld [vmem:[%s3 + $0x3c] sm:$0xf]
  %v195 = vld [vmem:[%s3 + $0x40] sm:$0xf]
  %v196 = vld [vmem:[%s3 + $0x44] sm:$0xf]
  %v197 = vld [vmem:[%s3 + $0x48] sm:$0xf]
  %v198 = vld [vmem:[%s3 + $0x4c] sm:$0xf]
  %v199 = vld [vmem:[%s3 + $0x50] sm:$0xf]
  %v200 = vld [vmem:[%s3 + $0x54] sm:$0xf]
  %v201 = vld [vmem:[%s3 + $0x58] sm:$0xf]
  %v202 = vld [vmem:[%s3 + $0x5c] sm:$0xf]
  %v203 = vld [vmem:[%s3 + $0x60] sm:$0xf]
  %v204 = vld [vmem:[%s3 + $0x64] sm:$0xf]
  %v205 = vld [vmem:[%s3 + $0x68] sm:$0xf]
  %v206 = vld [vmem:[%s3 + $0x6c] sm:$0xf]
  %v207 = vld [vmem:[%s3 + $0x70] sm:$0xf]
  %v208 = vld [vmem:[%s3 + $0x74] sm:$0xf]
  %v209 = vld [vmem:[%s3 + $0x78] sm:$0xf]
  %v210 = vld [vmem:[%s3 + $0x7c] sm:$0xf]
  %v211 = vld [vmem:[%s4] sm:$0x1]
  %v213 = vlaneseq
  %v214 = vshrl.u32 %v213, 7
  %v215 = vsub.s32 0, %v214
  %v216 = vrot.slane %v211, %v215
  %v250 = vunpack.c.l.b16 %v179
  %v251 = vunpack.c.l.b16 %v180
  %v252 = vunpack.c.l.b16 %v181
  %v253 = vunpack.c.l.b16 %v182
  %v254 = vunpack.c.l.b16 %v183
  %v255 = vunpack.c.l.b16 %v184
  %v256 = vunpack.c.l.b16 %v185
  %v257 = vunpack.c.l.b16 %v186
  %v258 = vunpack.c.l.b16 %v187
  %v259 = vunpack.c.l.b16 %v188
  %v260 = vunpack.c.l.b16 %v189
  %v261 = vunpack.c.l.b16 %v190
  %v262 = vunpack.c.l.b16 %v191
  %v263 = vunpack.c.l.b16 %v192
  %v264 = vunpack.c.l.b16 %v193
  %v265 = vunpack.c.l.b16 %v194
  %v266 = vunpack.c.l.b16 %v195
  %v267 = vunpack.c.l.b16 %v196
  %v268 = vunpack.c.l.b16 %v197
  %v269 = vunpack.c.l.b16 %v198
  %v270 = vunpack.c.l.b16 %v199
  %v271 = vunpack.c.l.b16 %v200
  %v272 = vunpack.c.l.b16 %v201
  %v273 = vunpack.c.l.b16 %v202
  %v274 = vunpack.c.l.b16 %v203
  %v275 = vunpack.c.l.b16 %v204
  %v276 = vunpack.c.l.b16 %v205
  %v277 = vunpack.c.l.b16 %v206
  %v278 = vunpack.c.l.b16 %v207
  %v279 = vunpack.c.l.b16 %v208
  %v280 = vunpack.c.l.b16 %v209
  %v281 = vunpack.c.l.b16 %v210
  %v282 = vpack.c.b16 %v251, %v250
  %v283 = vpack.c.b16 %v253, %v252
  %v284 = vpack.c.b16 %v255, %v254
  %v285 = vpack.c.b16 %v257, %v256
  %v286 = vpack.c.b16 %v259, %v258
  %v287 = vpack.c.b16 %v261, %v260
  %v288 = vpack.c.b16 %v263, %v262
  %v289 = vpack.c.b16 %v265, %v264
  %v290 = vpack.c.b16 %v267, %v266
  %v291 = vpack.c.b16 %v269, %v268
  %v292 = vpack.c.b16 %v271, %v270
  %v293 = vpack.c.b16 %v273, %v272
  %v294 = vpack.c.b16 %v275, %v274
  %v295 = vpack.c.b16 %v277, %v276
  %v296 = vpack.c.b16 %v279, %v278
  %v297 = vpack.c.b16 %v281, %v280
  %314 = vmatprep.subr.bf16.mxu0 0
  %315 = vmatpush1.bf16.msra.mxu0 %v289
  %316 = vmatprep.subr.bf16.mxu0 0
  %317 = vmatpush1.bf16.msra.mxu0 %v288
  %318 = vmatprep.subr.bf16.mxu0 0
  %319 = vmatpush1.bf16.msra.mxu0 %v287
  %320 = vmatprep.subr.bf16.mxu0 0
  %321 = vmatpush1.bf16.msra.mxu0 %v286
  %322 = vmatprep.subr.bf16.mxu0 0
  %323 = vmatpush1.bf16.msra.mxu0 %v285
  %324 = vmatprep.subr.bf16.mxu0 0
  %325 = vmatpush1.bf16.msra.mxu0 %v284
  %326 = vmatprep.subr.bf16.mxu0 0
  %327 = vmatpush1.bf16.msra.mxu0 %v283
  %328 = vmatprep.subr.bf16.mxu0 0
  %329 = vmatpush1.bf16.msra.mxu0 %v282
  %330 = vmatprep.subr.bf16.mxu0 0
  %331 = vmatpush2.bf16.msra.mxu0 %v297
  %332 = vmatprep.subr.bf16.mxu0 0
  %333 = vmatpush2.bf16.msra.mxu0 %v296
  %334 = vmatprep.subr.bf16.mxu0 0
  %335 = vmatpush2.bf16.msra.mxu0 %v295
  %336 = vmatprep.subr.bf16.mxu0 0
  %337 = vmatpush2.bf16.msra.mxu0 %v294
  %338 = vmatprep.subr.bf16.mxu0 0
  %339 = vmatpush2.bf16.msra.mxu0 %v293
  %340 = vmatprep.subr.bf16.mxu0 0
  %341 = vmatpush2.bf16.msra.mxu0 %v292
  %342 = vmatprep.subr.bf16.mxu0 0
  %343 = vmatpush2.bf16.msra.mxu0 %v291
  %344 = vmatprep.subr.bf16.mxu0 0
  %345 = vmatpush2.bf16.msra.mxu0 %v290
  %346 = vmatprep.mubr.bf16.mxu0 %v178
  %347 = vmatmul.mubr.bf16.gmra.mxu0 %v177
  %v348 = vpop.f32.mrf.mxu0
  %v349 = vadd.f32 %v216, %v348
  %v350 = vpop.f32.mrf.mxu0
  %v351 = vpop.f32.mrf.mxu0
  %v352 = vpop.f32.mrf.mxu0
  %353 = vdwg.mxu0
  %354 = vst [vmem:[%s6] sm:$0xff] %v349
  %355 = vmax.xlane.f32.xlu0 %v349
  %v356 = vpop.xlane.xlu0 %355
  %v357 = vsub.f32 %v349, %v356
  %v358 = vmul.f32 %v357, 1.442695
  %v359 = vpow.pop %v358
  %360 = vadd.xlane.f32.xlu0 %v359
  %v361 = vpop.xlane.xlu0 %360
  %v362 = vrcp.pop %v361
  %v363 = vmul.f32 %v359, %v362
  %364 = vst [vmem:[%s7] sm:$0xff] %v363
  // Predicated region
  $region22: #{cls_forward.1} parent=0 // pred_check
    _
  $region23: #{cls_forward.1} parent=0 // pred_check_branch
    %366 = sbr.rel (0) target = $region25
  $region24: #{cls_forward.1} parent=0 // pred_region
    _
  $region25: #{cls_forward.1} parent=0 // pred_fallthru
    _
  // Predicated region
  $region26: #{cls_forward.1} parent=0 // pred_check
    _
  $region27: #{cls_forward.1} parent=0 // pred_check_branch
    %368 = sbr.rel (0) target = $region29
  $region28: #{cls_forward.1} parent=0 // pred_region
    _
  $region29: #{cls_forward.1} parent=0 // pred_fallthru
    _
  // Predicated region
  $region30: #{cls_forward.1} parent=0 // pred_check
    _
  $region31: #{cls_forward.1} parent=0 // pred_check_branch
    %370 = sbr.rel (0) target = $region33
  $region32: #{cls_forward.1} parent=0 // pred_region
    _
  $region33: #{cls_forward.1} parent=0 // pred_fallthru
    _
  // Predicated region
  $region34: #{cls_forward.1} parent=0 // pred_check
    _
  $region35: #{cls_forward.1} parent=0 // pred_check_branch
    %372 = sbr.rel (0) target = $region37
  $region36: #{cls_forward.1} parent=0 // pred_region
    _
  $region37: #{cls_forward.1} parent=0 // pred_fallthru
    _
  // Predicated region
  $region38: #{cls_forward.1} parent=0 // pred_check
    _
  $region39: #{cls_forward.1} parent=0 // pred_check_branch
    %374 = sbr.rel (0) target = $region41
  $region40: #{cls_forward.1} parent=0 // pred_region
    _
  $region41: #{cls_forward.1} parent=0 // pred_fallthru
    _
  // Predicated region
  $region42: #{cls_forward.1} parent=0 // pred_check
    _
  $region43: #{cls_forward.1} parent=0 // pred_check_branch
    %376 = sbr.rel (0) target = $region45
  $region44: #{cls_forward.1} parent=0 // pred_region
    _
  $region45: #{cls_forward.1} parent=0 // pred_fallthru
    _

</llo_original>
